<compile_context>
chip_gen: v6e
topology: v6e:2x2x1
jax: 0.10.0
libtpu: 0.0.40
codegen_flags: <defaults>
</compile_context>

<pallas_src>
import jax
import jax.numpy as jnp
from jax.experimental import pallas as pl
from jax.experimental.pallas import tpu as pltpu


# ----------------------------------------------------------------------------
# Kernel body: copy the current VMEM tile (bitwise identity).
# ----------------------------------------------------------------------------
def _identity_kernel(x_ref, o_ref):
    o_ref[...] = x_ref[...]


# ----------------------------------------------------------------------------
# Generation-aware memory parameters.
# ----------------------------------------------------------------------------
def _tpu_memory_params():
    """Return (target_block_bytes, vmem_limit_bytes) for the local TPU."""
    vmem = None
    try:
        info = pltpu.get_tpu_info()
        vmem = getattr(info, "vmem_capacity_bytes", None)
    except Exception:
        vmem = None
    if vmem is not None and vmem <= (64 << 20):
        # v7x-class: 64 MiB VMEM but ~3.2 TB/s HBM -> bigger blocks amortize the
        # ~0.35 us/step pipeline overhead; 2x double-buffered 8 MiB = 32 MiB live.
        return 8 << 20, 40 << 20
    # v5e / v6e: 4 MiB blocks already sit at ~85% of HBM roofline; explicit
    # 32 MiB limit (v5e's default scoped VMEM is only 16 MiB).
    return 4 << 20, 32 << 20


def _lane_dense_factorization(n):
    """Largest lane-dense column count (multiple of 128) that divides n."""
    for cols in (8192, 4096, 2048, 1024, 512, 256, 128):
        if n % cols == 0:
            return n // cols, cols
    return None


def _pick_tile_rows(rows, cols, itemsize, block_bytes):
    """Rows per block: ~block_bytes-sized, sublane-packed, >=2 grid steps when possible."""
    # Sublane packing: 8 rows (f32), 16 (bf16/f16), 32 (int8/fp8).
    pack = 8 * max(1, 4 // max(1, itemsize))
    row_bytes = max(1, cols * itemsize)
    tile_rows = max(pack, (block_bytes // row_bytes) // pack * pack)
    if tile_rows >= rows:
        if rows >= 2 * pack:
            # Whole array fits in one block: still split into >=2 steps so the
            # write-back of step i-1 overlaps the read of step i (and the two
            # v7x TensorCores each take a share of the copy).
            tile_rows = max(pack, (rows // 2) // pack * pack)
        else:
            tile_rows = rows  # full-dim block is always legal
    return min(tile_rows, rows)


# ----------------------------------------------------------------------------
# Tiled 2-D identity copy.
# ----------------------------------------------------------------------------
def _identity_2d(x2d, tile_rows, vmem_limit_bytes):
    rows, cols = x2d.shape
    grid = (pl.cdiv(rows, tile_rows),)
    return pl.pallas_call(
        _identity_kernel,
        out_shape=jax.ShapeDtypeStruct((rows, cols), x2d.dtype),
        grid_spec=pltpu.PrefetchScalarGridSpec(
            num_scalar_prefetch=0,
            grid=grid,
            in_specs=[pl.BlockSpec((tile_rows, cols), lambda i: (i, 0))],
            out_specs=pl.BlockSpec((tile_rows, cols), lambda i: (i, 0)),
        ),
        # Identity: output may alias the input buffer.  With donation (see the
        # jitted wrappers below) no fresh HBM allocation is required.
        input_output_aliases={0: 0},
        compiler_params=pltpu.CompilerParams(
            # TODO(synk): try pltpu.CORE_PARALLEL on v7x (2 TCs); "parallel" is
            # the portable choice across v5e/v6e/v7x.
            dimension_semantics=("parallel",),
            vmem_limit_bytes=vmem_limit_bytes,
        ),
    )(x2d)


# ----------------------------------------------------------------------------
# Per-array transmit (trace-time shape dispatch; jitted below).
# ----------------------------------------------------------------------------
def _transmit_array_impl(x):
    orig_shape = x.shape
    n = x.size
    if n == 0:
        return x
    itemsize = jnp.dtype(x.dtype).itemsize
    block_bytes, vmem_limit = _tpu_memory_params()

    fact = _lane_dense_factorization(n)
    if fact is not None:
        # Aligned fast path: metadata-only reshape to a lane-dense (R, C) slab.
        rows, cols = fact
        tile_rows = _pick_tile_rows(rows, cols, itemsize, block_bytes)
        out = _identity_2d(x.reshape(rows, cols), tile_rows, vmem_limit)
        return out.reshape(orig_shape)

    # Unaligned element count: single full-shape block (always legal), no
    # pad / slice round trips outside the kernel.
    if n * itemsize <= block_bytes:
        out = _identity_2d(x.reshape(1, n), 1, vmem_limit)
        return out.reshape(orig_shape)

    # Large unaligned tensor: identity moves 0 bytes — returning the input is
    # the optimum and keeps semantics exact.
    # TODO(synk): if an explicit HBM copy is ever required here, split into an
    # aligned prefix (tiled path) plus a small full-block tail.
    return x


_transmit_jit = jax.jit(_transmit_array_impl)
_transmit_jit_donated = jax.jit(_transmit_array_impl, donate_argnums=(0,))

# Below this size the fixed pallas_call dispatch cost dwarfs the copy; identity
# is returned directly (0 bytes moved).
_DEFAULT_MIN_KERNEL_BYTES = 1 << 20


def transmit_identity(x, *, min_kernel_bytes=_DEFAULT_MIN_KERNEL_BYTES, donate=False):
    """Identity channel for a single value.

    JAX arrays at least `min_kernel_bytes` large are streamed through the
    Pallas copy kernel; everything else (small arrays, scalars, numpy arrays,
    metadata) passes through untouched — exactly the module's semantics.
    """
    if not isinstance(x, jax.Array):
        return x
    if x.size == 0:
        return x
    nbytes = x.size * jnp.dtype(x.dtype).itemsize
    if nbytes < min_kernel_bytes:
        return x
    fn = _transmit_jit_donated if donate else _transmit_jit
    return fn(x)


class TransmitterIdentity:
    """JAX/Pallas analogue of the PyTorch TransmitterIdentity module."""

    def __init__(self, device=None, *, min_kernel_bytes=_DEFAULT_MIN_KERNEL_BYTES,
                 donate=False):
        # No parameters: the module's __init__ defines no weights.
        self._device = device
        self._min_kernel_bytes = min_kernel_bytes
        self._donate = donate

    def check_required_input(self, **kwargs):
        # TODO(synk): Component.check_required_input semantics not given;
        # accept any non-empty kwargs.
        if not kwargs:
            raise ValueError(
                "TransmitterIdentity.forward requires at least one input")

    def forward(self, **kwargs):
        self.check_required_input(**kwargs)
        return {
            k: transmit_identity(v, min_kernel_bytes=self._min_kernel_bytes,
                                 donate=self._donate)
            for k, v in kwargs.items()
        }

    __call__ = forward


if __name__ == "__main__":
    key = jax.random.PRNGKey(0)
    k1, k2, k3, k4 = jax.random.split(key, 4)

    # Small example inputs consistent with an encoder->decoder channel.
    z = jax.random.normal(k1, (2, 4, 16, 16), dtype=jnp.float32)      # aligned, 1 block
    mu = jax.random.normal(k2, (2, 32), dtype=jnp.float32)            # unaligned, full-shape block
    h = jax.random.normal(k3, (2, 8, 32), dtype=jnp.float32).astype(jnp.bfloat16)  # bf16 aligned
    feat = jax.random.normal(k4, (64, 1024), dtype=jnp.float32)       # multi-step tiled grid

    # min_kernel_bytes=0 forces every tensor through the Pallas kernel so all
    # code paths are exercised; the production default (1 MiB) short-circuits
    # small tensors entirely.
    transmitter = TransmitterIdentity(device=None, min_kernel_bytes=0)
    out = transmitter.forward(z=z, mu=mu, h=h, feat=feat)
    jax.block_until_ready(out)

    # Default-threshold path: small tensors pass straight through (no kernel,
    # same object returned).
    fast = TransmitterIdentity(device=None)
    out_fast = fast.forward(z=z, mu=mu)

    # Verify identity semantics exactly (shape, dtype, bitwise values).
    for name, ref in (("z", z), ("mu", mu), ("h", h), ("feat", feat)):
        got = out[name]
        assert got.shape == ref.shape and got.dtype == ref.dtype
        assert bool(jnp.all(got == ref))
    assert out_fast["z"] is z and out_fast["mu"] is mu

    print("KERNEL_OK")
</pallas_src>

<mosaic_0001>
module attributes {stable_mosaic.version = 11 : i64} {
  func.func @_identity_kernel(%arg0: i32, %arg1: memref<1x2048xf32, #tpu.memory_space<vmem>>, %arg2: memref<1x2048xf32, #tpu.memory_space<vmem>>) attributes {dimension_semantics = [#tpu.dimension_semantics<parallel>], iteration_bounds = array<i64: 1>, scalar_prefetch = 0 : i64, scratch_operands = 0 : i64, tpu.core_type = #tpu.core_type<tc>, window_params = [{transform_indices = @transform_0, window_bounds = array<i64: 1, 2048>}, {transform_indices = @transform_1, window_bounds = array<i64: 1, 2048>}]} {
    %c0 = arith.constant 0 : index
    %c0_0 = arith.constant 0 : index
    %0 = vector.load %arg1[%c0, %c0_0] : memref<1x2048xf32, #tpu.memory_space<vmem>>, vector<1x2048xf32>
    %c0_1 = arith.constant 0 : index
    %c0_2 = arith.constant 0 : index
    %1 = vector.load %arg2[%c0_1, %c0_2] : memref<1x2048xf32, #tpu.memory_space<vmem>>, vector<1x2048xf32>
    tpu.vector_store %arg2[%c0_1, %c0_2], %0 {strides = array<i32>} : memref<1x2048xf32, #tpu.memory_space<vmem>>, vector<1x2048xf32>,
    return
  }
  func.func @transform_0(%arg0: i32) -> (i32, i32) {
    %c0_i32 = arith.constant 0 : i32
    %c0_i32_0 = arith.constant 0 : i32
    return %arg0, %c0_i32 : i32, i32
  }
  func.func @transform_1(%arg0: i32) -> (i32, i32) {
    %c0_i32 = arith.constant 0 : i32
    %c0_i32_0 = arith.constant 0 : i32
    return %arg0, %c0_i32 : i32, i32
  }
}

</mosaic_0001>

<llo_original>
// kernel: _transmit_array_impl.1
$region0: #{_transmit_array_impl.1}
  #allocation0 [shape = 'u32[]', space=smem, size = 0x4, offset = 0x4, fixed_abs, tag = 'smem constant byte address 0x4 - core index']
  #allocation1 [shape = 'u32[144,128]{1,0:T(1,128)}', space=vmem, size = 0x12000, scoped, tag = 'internal scratch']
  %s0 = inlined_call_operand.vmem [shape: f32[1,2048], index: 0, kind: input, shape index: {}, may-alias: {0,1}]
  %s1 = inlined_call_operand.vmem [shape: f32[1,2048], index: 1, kind: output, shape index: {}, may-alias: {0,1}]
  %s2 = sld [smem:[#allocation0]]
  $region14: #{_transmit_array_impl.1} parent=0
    _
  %s4 = ssub.s32 1, %s2
  %s5 = scalar_select 0, %s4, %s2
  // Predicated region
  $region2: #{_transmit_array_impl.1} parent=0 // pred_check
    _
  $region3: #{_transmit_array_impl.1} parent=0 // pred_check_branch
    %7 = sbr.rel (0) target = $region5
  $region4: #{_transmit_array_impl.1} parent=0 // pred_region
    _
  $region5: #{_transmit_array_impl.1} parent=0 // pred_fallthru
    _
  %v8 = vld [vmem:[%s0] sm:$0xff]
  %v9 = vld [vmem:[%s0 + $0x8] sm:$0xff]
  %10 = vst [vmem:[%s1] sm:$0xff] %v8
  %11 = vst [vmem:[%s1 + $0x8] sm:$0xff] %v9
  // Predicated region
  $region6: #{_transmit_array_impl.1} parent=0 // pred_check
    _
  $region7: #{_transmit_array_impl.1} parent=0 // pred_check_branch
    %13 = sbr.rel (0) target = $region9
  $region8: #{_transmit_array_impl.1} parent=0 // pred_region
    _
  $region9: #{_transmit_array_impl.1} parent=0 // pred_fallthru
    _
  // Predicated region
  $region10: #{_transmit_array_impl.1} parent=0 // pred_check
    _
  $region11: #{_transmit_array_impl.1} parent=0 // pred_check_branch
    %15 = sbr.rel (0) target = $region13
  $region12: #{_transmit_array_impl.1} parent=0 // pred_region
    _
  $region13: #{_transmit_array_impl.1} parent=0 // pred_fallthru
    _

</llo_original>
